<compile_context>
chip_gen: v5e
topology: v5e:2x2
jax: 0.10.0
libtpu: 0.0.40
codegen_flags: <defaults>
</compile_context>

<pallas_src>
import functools

import jax
import jax.numpy as jnp
from jax.experimental import pallas as pl
from jax.experimental.pallas import tpu as pltpu

H1 = 256       # first hidden width
H2 = 96        # second hidden width (as in the PyTorch module)
H2_PAD = 128   # zero-padded hidden-2 width used inside the kernel


def mlp_kernel(x_ref, w1_ref, b1_ref, w2_ref, b2_ref, w3_ref, b3_ref, o_ref):
    # Layer 1: Linear(D, 256) + ReLU        (Dropout = identity in eval mode)
    h1 = jnp.dot(x_ref[...], w1_ref[...], preferred_element_type=jnp.float32)
    h1 = jnp.maximum(h1 + b1_ref[...], 0.0)

    # Layer 2: Linear(256, 96 -> 128 zero-padded) + ReLU
    h2 = jnp.dot(h1, w2_ref[...], preferred_element_type=jnp.float32)
    h2 = jnp.maximum(h2 + b2_ref[...], 0.0)

    # Layer 3: Linear(96 -> 128 padded, 1).  An N=1 matmul wastes the MXU, so
    # do it on the VPU (row-wise multiply by w3) + XLU (cross-lane reduce) and
    # write the result lane-dense: batch on the lane axis, block (1, block_b).
    row = jnp.sum(h2 * w3_ref[...], axis=-1)          # (block_b,)
    out_row = row.reshape(1, -1) + b3_ref[...]        # (1, block_b)
    o_ref[...] = out_row.astype(o_ref.dtype)


def _round_up(n, m):
    return ((n + m - 1) // m) * m


@functools.partial(jax.jit, static_argnames=("block_b",))
def mlp_forward(x, w1, b1, w2, b2, w3, b3, *, block_b=512):
    # Support arbitrary leading dims like nn.Linear: (..., D) -> (..., 1).
    lead_shape = x.shape[:-1]
    D = x.shape[-1]
    x2d = x.reshape(-1, D)
    B = x2d.shape[0]

    # Batch tile: multiple of 128, clamped so tiny batches don't over-pad.
    block_b = min(block_b, _round_up(B, 128))
    B_pad = _round_up(B, block_b)
    if B_pad != B:
        x2d = jnp.pad(x2d, ((0, B_pad - B), (0, 0)))

    # Zero-pad hidden-2 (96 -> 128) so layer-2/3 use full 128-lane vregs.
    w2p = jnp.pad(w2, ((0, 0), (0, H2_PAD - H2)))
    b2p = jnp.pad(b2, ((0, 0), (0, H2_PAD - H2)))
    w3row = jnp.pad(w3[:, 0], (0, H2_PAD - H2)).reshape(1, H2_PAD)

    grid = (B_pad // block_b,)

    flops = 2 * B_pad * (D * H1 + H1 * H2_PAD + H2_PAD)
    bytes_accessed = 4 * (
        B_pad * D + B_pad                       # x in, out
        + D * H1 + H1 + H1 * H2_PAD + H2_PAD    # W1,b1,W2,b2
        + H2_PAD + 1                            # w3,b3
    )

    out = pl.pallas_call(
        mlp_kernel,
        out_shape=jax.ShapeDtypeStruct((1, B_pad), x.dtype),
        grid_spec=pltpu.PrefetchScalarGridSpec(
            num_scalar_prefetch=0,
            grid=grid,
            in_specs=[
                pl.BlockSpec((block_b, D), lambda i: (i, 0)),    # x tile
                pl.BlockSpec((D, H1), lambda i: (0, 0)),         # W1 (resident)
                pl.BlockSpec((1, H1), lambda i: (0, 0)),         # b1
                pl.BlockSpec((H1, H2_PAD), lambda i: (0, 0)),    # W2 (padded)
                pl.BlockSpec((1, H2_PAD), lambda i: (0, 0)),     # b2 (padded)
                pl.BlockSpec((1, H2_PAD), lambda i: (0, 0)),     # w3 row (padded)
                pl.BlockSpec((1, 1), lambda i: (0, 0)),          # b3
            ],
            # Lane-dense output: batch on the lane axis, one block per grid step.
            out_specs=pl.BlockSpec((1, block_b), lambda i: (0, i)),
        ),
        compiler_params=pltpu.CompilerParams(
            dimension_semantics=("parallel",),
        ),
        cost_estimate=pl.CostEstimate(
            flops=flops, transcendentals=0, bytes_accessed=bytes_accessed
        ),
    )(x2d, w1, b1, w2p, b2p, w3row, b3)

    # (1, B_pad) lane-major -> (..., 1)
    return out[0, :B].reshape(*lead_shape, 1)


def init_params(key, input_size):
    """Deterministic init mimicking torch.nn.Linear's U(-1/sqrt(fan_in), +1/sqrt(fan_in))."""
    ks = jax.random.split(key, 6)

    def linear(kw, kb, fan_in, fan_out):
        bound = 1.0 / jnp.sqrt(fan_in)
        w = jax.random.uniform(kw, (fan_in, fan_out), jnp.float32, -bound, bound)
        b = jax.random.uniform(kb, (1, fan_out), jnp.float32, -bound, bound)
        return w, b

    w1, b1 = linear(ks[0], ks[1], input_size, H1)
    w2, b2 = linear(ks[2], ks[3], H1, H2)
    w3, b3 = linear(ks[4], ks[5], H2, 1)
    return w1, b1, w2, b2, w3, b3


def mlp_reference(x, w1, b1, w2, b2, w3, b3):
    h1 = jnp.maximum(x @ w1 + b1, 0.0)
    h2 = jnp.maximum(h1 @ w2 + b2, 0.0)
    return h2 @ w3 + b3


if __name__ == "__main__":
    key = jax.random.PRNGKey(0)
    k_x, k_x2, k_p = jax.random.split(key, 3)

    input_size = 32
    params = init_params(k_p, input_size)

    # Small-shape check (batch=8): block_b clamps to 128, single grid step.
    x = jax.random.normal(k_x, (8, input_size), jnp.float32)
    out = jax.block_until_ready(mlp_forward(x, *params))
    ref = mlp_reference(x, *params)
    assert out.shape == (8, 1), out.shape
    assert jnp.allclose(out, ref, atol=1e-5, rtol=1e-5), (
        f"max abs err {jnp.max(jnp.abs(out - ref))}"
    )

    # Multi-block + ragged-batch check (batch=300, block_b=128 -> grid of 3).
    x2 = jax.random.normal(k_x2, (300, input_size), jnp.float32)
    out2 = jax.block_until_ready(mlp_forward(x2, *params, block_b=128))
    ref2 = mlp_reference(x2, *params)
    assert out2.shape == (300, 1), out2.shape
    assert jnp.allclose(out2, ref2, atol=1e-5, rtol=1e-5), (
        f"max abs err {jnp.max(jnp.abs(out2 - ref2))}"
    )

    print("KERNEL_OK")
</pallas_src>

<mosaic_0001>
module attributes {stable_mosaic.version = 11 : i64} {
  func.func @mlp_kernel(%arg0: i32, %arg1: memref<128x32xf32, #tpu.memory_space<vmem>>, %arg2: memref<32x256xf32, #tpu.memory_space<vmem>>, %arg3: memref<1x256xf32, #tpu.memory_space<vmem>>, %arg4: memref<256x128xf32, #tpu.memory_space<vmem>>, %arg5: memref<1x128xf32, #tpu.memory_space<vmem>>, %arg6: memref<1x128xf32, #tpu.memory_space<vmem>>, %arg7: memref<1x1xf32, #tpu.memory_space<vmem>>, %arg8: memref<1x128xf32, #tpu.memory_space<vmem>>) attributes {dimension_semantics = [#tpu.dimension_semantics<parallel>], iteration_bounds = array<i64: 1>, scalar_prefetch = 0 : i64, scratch_operands = 0 : i64, tpu.core_type = #tpu.core_type<tc>, window_params = [{transform_indices = @transform_0, window_bounds = array<i64: 128, 32>}, {pipeline_mode = #tpu.pipeline_mode<synchronous>, transform_indices = @transform_1, window_bounds = array<i64: 32, 256>}, {pipeline_mode = #tpu.pipeline_mode<synchronous>, transform_indices = @transform_2, window_bounds = array<i64: 1, 256>}, {pipeline_mode = #tpu.pipeline_mode<synchronous>, transform_indices = @transform_3, window_bounds = array<i64: 256, 128>}, {pipeline_mode = #tpu.pipeline_mode<synchronous>, transform_indices = @transform_4, window_bounds = array<i64: 1, 128>}, {pipeline_mode = #tpu.pipeline_mode<synchronous>, transform_indices = @transform_5, window_bounds = array<i64: 1, 128>}, {pipeline_mode = #tpu.pipeline_mode<synchronous>, transform_indices = @transform_6, window_bounds = array<i64: 1, 1>}, {transform_indices = @transform_7, window_bounds = array<i64: 1, 128>}]} {
    %c0 = arith.constant 0 : index
    %c0_0 = arith.constant 0 : index
    %0 = vector.load %arg1[%c0, %c0_0] : memref<128x32xf32, #tpu.memory_space<vmem>>, vector<128x32xf32>
    %c0_1 = arith.constant 0 : index
    %c0_2 = arith.constant 0 : index
    %1 = vector.load %arg2[%c0_1, %c0_2] : memref<32x256xf32, #tpu.memory_space<vmem>>, vector<32x256xf32>
    %cst = arith.constant dense<0.000000e+00> : vector<128x256xf32>
    %2 = tpu.matmul %0, %1, %cst {dimension_numbers = #tpu.dot_dimension_numbers<[1], [0], [0], [1], [0, 0, 1, 1], [], []>} : vector<128x32xf32>, vector<32x256xf32>, vector<128x256xf32> -> vector<128x256xf32>
    %c0_3 = arith.constant 0 : index
    %c0_4 = arith.constant 0 : index
    %3 = vector.load %arg3[%c0_3, %c0_4] : memref<1x256xf32, #tpu.memory_space<vmem>>, vector<1x256xf32>
    %4 = vector.broadcast %3 : vector<1x256xf32> to vector<128x256xf32>
    %5 = arith.addf %2, %4 : vector<128x256xf32>
    %cst_5 = arith.constant 0.000000e+00 : f32
    %6 = vector.broadcast %cst_5 : f32 to vector<128x256xf32>
    %7 = arith.maximumf %5, %6 : vector<128x256xf32>
    %c0_6 = arith.constant 0 : index
    %c0_7 = arith.constant 0 : index
    %8 = vector.load %arg4[%c0_6, %c0_7] : memref<256x128xf32, #tpu.memory_space<vmem>>, vector<256x128xf32>
    %cst_8 = arith.constant dense<0.000000e+00> : vector<128x128xf32>
    %9 = tpu.matmul %7, %8, %cst_8 {dimension_numbers = #tpu.dot_dimension_numbers<[1], [0], [0], [1], [0, 0, 1, 1], [], []>} : vector<128x256xf32>, vector<256x128xf32>, vector<128x128xf32> -> vector<128x128xf32>
    %c0_9 = arith.constant 0 : index
    %c0_10 = arith.constant 0 : index
    %10 = vector.load %arg5[%c0_9, %c0_10] : memref<1x128xf32, #tpu.memory_space<vmem>>, vector<1x128xf32>
    %11 = vector.broadcast %10 : vector<1x128xf32> to vector<128x128xf32>
    %12 = arith.addf %9, %11 : vector<128x128xf32>
    %cst_11 = arith.constant 0.000000e+00 : f32
    %13 = vector.broadcast %cst_11 : f32 to vector<128x128xf32>
    %14 = arith.maximumf %12, %13 : vector<128x128xf32>
    %c0_12 = arith.constant 0 : index
    %c0_13 = arith.constant 0 : index
    %15 = vector.load %arg6[%c0_12, %c0_13] : memref<1x128xf32, #tpu.memory_space<vmem>>, vector<1x128xf32>
    %16 = vector.broadcast %15 : vector<1x128xf32> to vector<128x128xf32>
    %17 = arith.mulf %14, %16 : vector<128x128xf32>
    %cst_14 = arith.constant dense<0.000000e+00> : vector<128xf32>
    %18 = vector.multi_reduction <add>, %17, %cst_14 [1] : vector<128x128xf32> to vector<128xf32>
    %19 = vector.shape_cast %18 : vector<128xf32> to vector<1x128xf32>
    %c0_15 = arith.constant 0 : index
    %c0_16 = arith.constant 0 : index
    %20 = vector.load %arg7[%c0_15, %c0_16] : memref<1x1xf32, #tpu.memory_space<vmem>>, vector<1x1xf32>
    %21 = vector.broadcast %20 : vector<1x1xf32> to vector<1x128xf32>
    %22 = arith.addf %19, %21 : vector<1x128xf32>
    %c0_17 = arith.constant 0 : index
    %c0_18 = arith.constant 0 : index
    %23 = vector.load %arg8[%c0_17, %c0_18] : memref<1x128xf32, #tpu.memory_space<vmem>>, vector<1x128xf32>
    tpu.vector_store %arg8[%c0_17, %c0_18], %22 {strides = array<i32>} : memref<1x128xf32, #tpu.memory_space<vmem>>, vector<1x128xf32>,
    return
  }
  func.func @transform_0(%arg0: i32) -> (i32, i32) {
    %c0_i32 = arith.constant 0 : i32
    %c0_i32_0 = arith.constant 0 : i32
    return %arg0, %c0_i32 : i32, i32
  }
  func.func @transform_1(%arg0: i32) -> (i32, i32) {
    %c0_i32 = arith.constant 0 : i32
    %c0_i32_0 = arith.constant 0 : i32
    %c0_i32_1 = arith.constant 0 : i32
    return %c0_i32, %c0_i32_0 : i32, i32
  }
  func.func @transform_2(%arg0: i32) -> (i32, i32) {
    %c0_i32 = arith.constant 0 : i32
    %c0_i32_0 = arith.constant 0 : i32
    %c0_i32_1 = arith.constant 0 : i32
    return %c0_i32, %c0_i32_0 : i32, i32
  }
  func.func @transform_3(%arg0: i32) -> (i32, i32) {
    %c0_i32 = arith.constant 0 : i32
    %c0_i32_0 = arith.constant 0 : i32
    %c0_i32_1 = arith.constant 0 : i32
    return %c0_i32, %c0_i32_0 : i32, i32
  }
  func.func @transform_4(%arg0: i32) -> (i32, i32) {
    %c0_i32 = arith.constant 0 : i32
    %c0_i32_0 = arith.constant 0 : i32
    %c0_i32_1 = arith.constant 0 : i32
    return %c0_i32, %c0_i32_0 : i32, i32
  }
  func.func @transform_5(%arg0: i32) -> (i32, i32) {
    %c0_i32 = arith.constant 0 : i32
    %c0_i32_0 = arith.constant 0 : i32
    %c0_i32_1 = arith.constant 0 : i32
    return %c0_i32, %c0_i32_0 : i32, i32
  }
  func.func @transform_6(%arg0: i32) -> (i32, i32) {
    %c0_i32 = arith.constant 0 : i32
    %c0_i32_0 = arith.constant 0 : i32
    %c0_i32_1 = arith.constant 0 : i32
    return %c0_i32, %c0_i32_0 : i32, i32
  }
  func.func @transform_7(%arg0: i32) -> (i32, i32) {
    %c0_i32 = arith.constant 0 : i32
    %c0_i32_0 = arith.constant 0 : i32
    return %c0_i32, %arg0 : i32, i32
  }
}

</mosaic_0001>

<llo_original>
// kernel: mlp_forward.1
$region0: #{mlp_forward.1}
  #allocation0 [shape = 'u32[]', space=smem, size = 0x4, offset = 0x4, fixed_abs, tag = 'smem constant byte address 0x4 - core index']
  #allocation1 [shape = 'u32[72,128]{1,0:T(1,128)}', space=vmem, size = 0x9000, scoped, tag = 'internal scratch']
  #allocation2 [shape = 'f32[1,1]{1,0:T(1,128)S(1)}', space=vmem, size = 0x200, scoped, tag = 'scoped memory for mlp_forward.1']
  %s0 = inlined_call_operand.vmem [shape: f32[128,32], index: 0, kind: input, shape index: {}]
  %s1 = inlined_call_operand.vmem [shape: f32[32,256], index: 1, kind: input, shape index: {}]
  %s2 = inlined_call_operand.vmem [shape: f32[1,256], index: 2, kind: input, shape index: {}]
  %s3 = inlined_call_operand.vmem [shape: f32[256,128], index: 3, kind: input, shape index: {}]
  %s4 = inlined_call_operand.vmem [shape: f32[1,128], index: 4, kind: input, shape index: {}]
  %s5 = inlined_call_operand.vmem [shape: f32[1,128], index: 5, kind: input, shape index: {}]
  %s6 = inlined_call_operand.<no memory space> [shape: f32[1,1], index: 6, kind: input, shape index: {}]
  %s7 = inlined_call_operand.vmem [shape: f32[1,128], index: 7, kind: output, shape index: {}]
  %s8 = sld [smem:[#allocation0]]
  $region38: #{mlp_forward.1} parent=0
    _
  %s10 = ssub.s32 1, %s8
  %s11 = scalar_select 0, %s10, %s8
  %v12 = vstv %s6
  %13 = vst [vmem:[#allocation2] sm:$0x1] %v12
  // Predicated region
  $region2: #{mlp_forward.1} parent=0 // pred_check
    _
  $region3: #{mlp_forward.1} parent=0 // pred_check_branch
    %15 = sbr.rel (0) target = $region5
  $region4: #{mlp_forward.1} parent=0 // pred_region
    _
  $region5: #{mlp_forward.1} parent=0 // pred_fallthru
    _
  // Predicated region
  $region6: #{mlp_forward.1} parent=0 // pred_check
    _
  $region7: #{mlp_forward.1} parent=0 // pred_check_branch
    %17 = sbr.rel (0) target = $region9
  $region8: #{mlp_forward.1} parent=0 // pred_region
    _
  $region9: #{mlp_forward.1} parent=0 // pred_fallthru
    _
  // Predicated region
  $region10: #{mlp_forward.1} parent=0 // pred_check
    _
  $region11: #{mlp_forward.1} parent=0 // pred_check_branch
    %19 = sbr.rel (0) target = $region13
  $region12: #{mlp_forward.1} parent=0 // pred_region
    _
  $region13: #{mlp_forward.1} parent=0 // pred_fallthru
    _
  // Predicated region
  $region14: #{mlp_forward.1} parent=0 // pred_check
    _
  $region15: #{mlp_forward.1} parent=0 // pred_check_branch
    %21 = sbr.rel (0) target = $region17
  $region16: #{mlp_forward.1} parent=0 // pred_region
    _
  $region17: #{mlp_forward.1} parent=0 // pred_fallthru
    _
  // Predicated region
  $region18: #{mlp_forward.1} parent=0 // pred_check
    _
  $region19: #{mlp_forward.1} parent=0 // pred_check_branch
    %23 = sbr.rel (0) target = $region21
  $region20: #{mlp_forward.1} parent=0 // pred_region
    _
  $region21: #{mlp_forward.1} parent=0 // pred_fallthru
    _
  // Predicated region
  $region22: #{mlp_forward.1} parent=0 // pred_check
    _
  $region23: #{mlp_forward.1} parent=0 // pred_check_branch
    %25 = sbr.rel (0) target = $region25
  $region24: #{mlp_forward.1} parent=0 // pred_region
    _
  $region25: #{mlp_forward.1} parent=0 // pred_fallthru
    _
  // Predicated region
  $region26: #{mlp_forward.1} parent=0 // pred_check
    _
  $region27: #{mlp_forward.1} parent=0 // pred_check_branch
    %27 = sbr.rel (0) target = $region29
  $region28: #{mlp_forward.1} parent=0 // pred_region
    _
  $region29: #{mlp_forward.1} parent=0 // pred_fallthru
    _
  %v28 = vld [vmem:[%s0] sm:$0xff]
  %v29 = vld [vmem:[%s0 + $0x8] sm:$0xff]
  %v30 = vld [vmem:[%s0 + $0x10] sm:$0xff]
  %v31 = vld [vmem:[%s0 + $0x18] sm:$0xff]
  %v32 = vld [vmem:[%s0 + $0x20] sm:$0xff]
  %v33 = vld [vmem:[%s0 + $0x28] sm:$0xff]
  %v34 = vld [vmem:[%s0 + $0x30] sm:$0xff]
  %v35 = vld [vmem:[%s0 + $0x38] sm:$0xff]
  %v36 = vld [vmem:[%s0 + $0x40] sm:$0xff]
  %v37 = vld [vmem:[%s0 + $0x48] sm:$0xff]
  %v38 = vld [vmem:[%s0 + $0x50] sm:$0xff]
  %v39 = vld [vmem:[%s0 + $0x58] sm:$0xff]
  %v40 = vld [vmem:[%s0 + $0x60] sm:$0xff]
  %v41 = vld [vmem:[%s0 + $0x68] sm:$0xff]
  %v42 = vld [vmem:[%s0 + $0x70] sm:$0xff]
  %v43 = vld [vmem:[%s0 + $0x78] sm:$0xff]
  %v44 = vld [vmem:[%s1] sm:$0xff]
  %v45 = vld [vmem:[%s1 + $0x8] sm:$0xff]
  %v46 = vld [vmem:[%s1 + $0x10] sm:$0xff]
  %v47 = vld [vmem:[%s1 + $0x18] sm:$0xff]
  %v48 = vld [vmem:[%s1 + $0x20] sm:$0xff]
  %v49 = vld [vmem:[%s1 + $0x28] sm:$0xff]
  %v50 = vld [vmem:[%s1 + $0x30] sm:$0xff]
  %v51 = vld [vmem:[%s1 + $0x38] sm:$0xff]
  %v52 = vld [vmem:[%s2] sm:$0x3]
  %v54 = vperm.slane %v52, 0
  %v55 = vperm.slane %v52, 1
  %vm58 = vcmask 261120
  %v60 = vsel %vm58, %v28, 0
  %v63 = vsel %vm58, %v29, 0
  %v66 = vsel %vm58, %v30, 0
  %v69 = vsel %vm58, %v31, 0
  %v72 = vsel %vm58, %v32, 0
  %v75 = vsel %vm58, %v33, 0
  %v78 = vsel %vm58, %v34, 0
  %v81 = vsel %vm58, %v35, 0
  %v84 = vsel %vm58, %v36, 0
  %v87 = vsel %vm58, %v37, 0
  %v90 = vsel %vm58, %v38, 0
  %v93 = vsel %vm58, %v39, 0
  %v96 = vsel %vm58, %v40, 0
  %v99 = vsel %vm58, %v41, 0
  %v102 = vsel %vm58, %v42, 0
  %v105 = vsel %vm58, %v43, 0
  %107 = vmatpush.msra.mxu0 0.0
  %108 = vmatpush.msra.mxu0 0.0
  %109 = vmatpush.msra.mxu0 0.0
  %110 = vmatpush.msra.mxu0 0.0
  %111 = vmatpush.msra.mxu0 0.0
  %112 = vmatpush.msra.mxu0 0.0
  %113 = vmatpush.msra.mxu0 0.0
  %114 = vmatpush.msra.mxu0 0.0
  %115 = vmatpush.msra.mxu0 0.0
  %116 = vmatpush.msra.mxu0 0.0
  %117 = vmatpush.msra.mxu0 0.0
  %118 = vmatpush.msra.mxu0 0.0
  %119 = vmatpush.msra.mxu0 %v50
  %120 = vmatpush.msra.mxu0 %v48
  %121 = vmatpush.msra.mxu0 %v46
  %122 = vmatpush.msra.mxu0 %v44
  %123 = vmatmul.f32.gmra.mxu0 %v60
  %v124 = vpop.f32.mrf.mxu0
  %v125 = vadd.f32 %v54, %v124
  %126 = vmatmul.f32.gmra.mxu0 %v63
  %v127 = vpop.f32.mrf.mxu0
  %v128 = vadd.f32 %v54, %v127
  %129 = vmatmul.f32.gmra.mxu0 %v66
  %v130 = vpop.f32.mrf.mxu0
  %v131 = vadd.f32 %v54, %v130
  %132 = vmatmul.f32.gmra.mxu0 %v69
  %v133 = vpop.f32.mrf.mxu0
  %v134 = vadd.f32 %v54, %v133
  %135 = vmatmul.f32.gmra.mxu0 %v72
  %v136 = vpop.f32.mrf.mxu0
  %v137 = vadd.f32 %v54, %v136
  %138 = vmatmul.f32.gmra.mxu0 %v75
  %v139 = vpop.f32.mrf.mxu0
  %v140 = vadd.f32 %v54, %v139
  %141 = vmatmul.f32.gmra.mxu0 %v78
  %v142 = vpop.f32.mrf.mxu0
  %v143 = vadd.f32 %v54, %v142
  %144 = vmatmul.f32.gmra.mxu0 %v81
  %v145 = vpop.f32.mrf.mxu0
  %v146 = vadd.f32 %v54, %v145
  %147 = vmatmul.f32.gmra.mxu0 %v84
  %v148 = vpop.f32.mrf.mxu0
  %v149 = vadd.f32 %v54, %v148
  %150 = vmatmul.f32.gmra.mxu0 %v87
  %v151 = vpop.f32.mrf.mxu0
  %v152 = vadd.f32 %v54, %v151
  %153 = vmatmul.f32.gmra.mxu0 %v90
  %v154 = vpop.f32.mrf.mxu0
  %v155 = vadd.f32 %v54, %v154
  %156 = vmatmul.f32.gmra.mxu0 %v93
  %v157 = vpop.f32.mrf.mxu0
  %v158 = vadd.f32 %v54, %v157
  %159 = vmatmul.f32.gmra.mxu0 %v96
  %v160 = vpop.f32.mrf.mxu0
  %v161 = vadd.f32 %v54, %v160
  %162 = vmatmul.f32.gmra.mxu0 %v99
  %v163 = vpop.f32.mrf.mxu0
  %v164 = vadd.f32 %v54, %v163
  %165 = vmatmul.f32.gmra.mxu0 %v102
  %v166 = vpop.f32.mrf.mxu0
  %v167 = vadd.f32 %v54, %v166
  %168 = vmatmul.f32.gmra.mxu0 %v105
  %v169 = vpop.f32.mrf.mxu0
  %v170 = vadd.f32 %v54, %v169
  %171 = vdwg.mxu0
  %172 = vmatpush.msra.mxu0 0.0
  %173 = vmatpush.msra.mxu0 0.0
  %174 = vmatpush.msra.mxu0 0.0
  %175 = vmatpush.msra.mxu0 0.0
  %176 = vmatpush.msra.mxu0 0.0
  %177 = vmatpush.msra.mxu0 0.0
  %178 = vmatpush.msra.mxu0 0.0
  %179 = vmatpush.msra.mxu0 0.0
  %180 = vmatpush.msra.mxu0 0.0
  %181 = vmatpush.msra.mxu0 0.0
  %182 = vmatpush.msra.mxu0 0.0
  %183 = vmatpush.msra.mxu0 0.0
  %184 = vmatpush.msra.mxu0 %v51
  %185 = vmatpush.msra.mxu0 %v49
  %186 = vmatpush.msra.mxu0 %v47
  %187 = vmatpush.msra.mxu0 %v45
  %188 = vmatmul.f32.gmra.mxu0 %v60
  %v189 = vpop.f32.mrf.mxu0
  %v190 = vadd.f32 %v55, %v189
  %191 = vmatmul.f32.gmra.mxu0 %v63
  %v192 = vpop.f32.mrf.mxu0
  %v193 = vadd.f32 %v55, %v192
  %194 = vmatmul.f32.gmra.mxu0 %v66
  %v195 = vpop.f32.mrf.mxu0
  %v196 = vadd.f32 %v55, %v195
  %197 = vmatmul.f32.gmra.mxu0 %v69
  %v198 = vpop.f32.mrf.mxu0
  %v199 = vadd.f32 %v55, %v198
  %200 = vmatmul.f32.gmra.mxu0 %v72
  %v201 = vpop.f32.mrf.mxu0
  %v202 = vadd.f32 %v55, %v201
  %203 = vmatmul.f32.gmra.mxu0 %v75
  %v204 = vpop.f32.mrf.mxu0
  %v205 = vadd.f32 %v55, %v204
  %206 = vmatmul.f32.gmra.mxu0 %v78
  %v207 = vpop.f32.mrf.mxu0
  %v208 = vadd.f32 %v55, %v207
  %209 = vmatmul.f32.gmra.mxu0 %v81
  %v210 = vpop.f32.mrf.mxu0
  %v211 = vadd.f32 %v55, %v210
  %212 = vmatmul.f32.gmra.mxu0 %v84
  %v213 = vpop.f32.mrf.mxu0
  %v214 = vadd.f32 %v55, %v213
  %215 = vmatmul.f32.gmra.mxu0 %v87
  %v216 = vpop.f32.mrf.mxu0
  %v217 = vadd.f32 %v55, %v216
  %218 = vmatmul.f32.gmra.mxu0 %v90
  %v219 = vpop.f32.mrf.mxu0
  %v220 = vadd.f32 %v55, %v219
  %221 = vmatmul.f32.gmra.mxu0 %v93
  %v222 = vpop.f32.mrf.mxu0
  %v223 = vadd.f32 %v55, %v222
  %224 = vmatmul.f32.gmra.mxu0 %v96
  %v225 = vpop.f32.mrf.mxu0
  %v226 = vadd.f32 %v55, %v225
  %227 = vmatmul.f32.gmra.mxu0 %v99
  %v228 = vpop.f32.mrf.mxu0
  %v229 = vadd.f32 %v55, %v228
  %230 = vmatmul.f32.gmra.mxu0 %v102
  %v231 = vpop.f32.mrf.mxu0
  %v232 = vadd.f32 %v55, %v231
  %233 = vmatmul.f32.gmra.mxu0 %v105
  %v234 = vpop.f32.mrf.mxu0
  %v235 = vadd.f32 %v55, %v234
  %236 = vdwg.mxu0
  %v237 = vmax.f32 %v125, 0.0
  %v238 = vmax.f32 %v190, 0.0
  %v239 = vmax.f32 %v128, 0.0
  %v240 = vmax.f32 %v193, 0.0
  %v241 = vmax.f32 %v131, 0.0
  %v242 = vmax.f32 %v196, 0.0
  %v243 = vmax.f32 %v134, 0.0
  %v244 = vmax.f32 %v199, 0.0
  %v245 = vmax.f32 %v137, 0.0
  %v246 = vmax.f32 %v202, 0.0
  %v247 = vmax.f32 %v140, 0.0
  %v248 = vmax.f32 %v205, 0.0
  %v249 = vmax.f32 %v143, 0.0
  %v250 = vmax.f32 %v208, 0.0
  %v251 = vmax.f32 %v146, 0.0
  %v252 = vmax.f32 %v211, 0.0
  %v253 = vmax.f32 %v149, 0.0
  %v254 = vmax.f32 %v214, 0.0
  %v255 = vmax.f32 %v152, 0.0
  %v256 = vmax.f32 %v217, 0.0
  %v257 = vmax.f32 %v155, 0.0
  %v258 = vmax.f32 %v220, 0.0
  %v259 = vmax.f32 %v158, 0.0
  %v260 = vmax.f32 %v223, 0.0
  %v261 = vmax.f32 %v161, 0.0
  %v262 = vmax.f32 %v226, 0.0
  %v263 = vmax.f32 %v164, 0.0
  %v264 = vmax.f32 %v229, 0.0
  %v265 = vmax.f32 %v167, 0.0
  %v266 = vmax.f32 %v232, 0.0
  %v267 = vmax.f32 %v170, 0.0
  %v268 = vmax.f32 %v235, 0.0
  %v269 = vld [vmem:[%s3] sm:$0xff]
  %v270 = vld [vmem:[%s3 + $0x8] sm:$0xff]
  %v271 = vld [vmem:[%s3 + $0x10] sm:$0xff]
  %v272 = vld [vmem:[%s3 + $0x18] sm:$0xff]
  %v273 = vld [vmem:[%s3 + $0x20] sm:$0xff]
  %v274 = vld [vmem:[%s3 + $0x28] sm:$0xff]
  %v275 = vld [vmem:[%s3 + $0x30] sm:$0xff]
  %v276 = vld [vmem:[%s3 + $0x38] sm:$0xff]
  %v277 = vld [vmem:[%s3 + $0x40] sm:$0xff]
  %v278 = vld [vmem:[%s3 + $0x48] sm:$0xff]
  %v279 = vld [vmem:[%s3 + $0x50] sm:$0xff]
  %v280 = vld [vmem:[%s3 + $0x58] sm:$0xff]
  %v281 = vld [vmem:[%s3 + $0x60] sm:$0xff]
  %v282 = vld [vmem:[%s3 + $0x68] sm:$0xff]
  %v283 = vld [vmem:[%s3 + $0x70] sm:$0xff]
  %v284 = vld [vmem:[%s3 + $0x78] sm:$0xff]
  %v285 = vld [vmem:[%s3 + $0x80] sm:$0xff]
  %v286 = vld [vmem:[%s3 + $0x88] sm:$0xff]
  %v287 = vld [vmem:[%s3 + $0x90] sm:$0xff]
  %v288 = vld [vmem:[%s3 + $0x98] sm:$0xff]
  %v289 = vld [vmem:[%s3 + $0xa0] sm:$0xff]
  %v290 = vld [vmem:[%s3 + $0xa8] sm:$0xff]
  %v291 = vld [vmem:[%s3 + $0xb0] sm:$0xff]
  %v292 = vld [vmem:[%s3 + $0xb8] sm:$0xff]
  %v293 = vld [vmem:[%s3 + $0xc0] sm:$0xff]
  %v294 = vld [vmem:[%s3 + $0xc8] sm:$0xff]
  %v295 = vld [vmem:[%s3 + $0xd0] sm:$0xff]
  %v296 = vld [vmem:[%s3 + $0xd8] sm:$0xff]
  %v297 = vld [vmem:[%s3 + $0xe0] sm:$0xff]
  %v298 = vld [vmem:[%s3 + $0xe8] sm:$0xff]
  %v299 = vld [vmem:[%s3 + $0xf0] sm:$0xff]
  %v300 = vld [vmem:[%s3 + $0xf8] sm:$0xff]
  %v301 = vld [vmem:[%s4] sm:$0x1]
  %v303 = vperm.slane %v301, 0
  %305 = vmatpush.msra.mxu0 %v284
  %306 = vmatpush.msra.mxu0 %v283
  %307 = vmatpush.msra.mxu0 %v282
  %308 = vmatpush.msra.mxu0 %v281
  %309 = vmatpush.msra.mxu0 %v280
  %310 = vmatpush.msra.mxu0 %v279
  %311 = vmatpush.msra.mxu0 %v278
  %312 = vmatpush.msra.mxu0 %v277
  %313 = vmatpush.msra.mxu0 %v276
  %314 = vmatpush.msra.mxu0 %v275
  %315 = vmatpush.msra.mxu0 %v274
  %316 = vmatpush.msra.mxu0 %v273
  %317 = vmatpush.msra.mxu0 %v272
  %318 = vmatpush.msra.mxu0 %v271
  %319 = vmatpush.msra.mxu0 %v270
  %320 = vmatpush.msra.mxu0 %v269
  %321 = vmatmul.f32.gmra.mxu0 %v237
  %v322 = vpop.f32.mrf.mxu0
  %v323 = vadd.f32 %v303, %v322
  %324 = vmatmul.f32.gmra.mxu0 %v239
  %v325 = vpop.f32.mrf.mxu0
  %v326 = vadd.f32 %v303, %v325
  %327 = vmatmul.f32.gmra.mxu0 %v241
  %v328 = vpop.f32.mrf.mxu0
  %v329 = vadd.f32 %v303, %v328
  %330 = vmatmul.f32.gmra.mxu0 %v243
  %v331 = vpop.f32.mrf.mxu0
  %v332 = vadd.f32 %v303, %v331
  %333 = vmatmul.f32.gmra.mxu0 %v245
  %v334 = vpop.f32.mrf.mxu0
  %v335 = vadd.f32 %v303, %v334
  %336 = vmatmul.f32.gmra.mxu0 %v247
  %v337 = vpop.f32.mrf.mxu0
  %v338 = vadd.f32 %v303, %v337
  %339 = vmatmul.f32.gmra.mxu0 %v249
  %v340 = vpop.f32.mrf.mxu0
  %v341 = vadd.f32 %v303, %v340
  %342 = vmatmul.f32.gmra.mxu0 %v251
  %v343 = vpop.f32.mrf.mxu0
  %v344 = vadd.f32 %v303, %v343
  %345 = vmatmul.f32.gmra.mxu0 %v253
  %v346 = vpop.f32.mrf.mxu0
  %v347 = vadd.f32 %v303, %v346
  %348 = vmatmul.f32.gmra.mxu0 %v255
  %v349 = vpop.f32.mrf.mxu0
  %v350 = vadd.f32 %v303, %v349
  %351 = vmatmul.f32.gmra.mxu0 %v257
  %v352 = vpop.f32.mrf.mxu0
  %v353 = vadd.f32 %v303, %v352
  %354 = vmatmul.f32.gmra.mxu0 %v259
  %v355 = vpop.f32.mrf.mxu0
  %v356 = vadd.f32 %v303, %v355
  %357 = vmatmul.f32.gmra.mxu0 %v261
  %v358 = vpop.f32.mrf.mxu0
  %v359 = vadd.f32 %v303, %v358
  %360 = vmatmul.f32.gmra.mxu0 %v263
  %v361 = vpop.f32.mrf.mxu0
  %v362 = vadd.f32 %v303, %v361
  %363 = vmatmul.f32.gmra.mxu0 %v265
  %v364 = vpop.f32.mrf.mxu0
  %v365 = vadd.f32 %v303, %v364
  %366 = vmatmul.f32.gmra.mxu0 %v267
  %v367 = vpop.f32.mrf.mxu0
  %v368 = vadd.f32 %v303, %v367
  %369 = vdwg.mxu0
  %370 = vmatpush.msra.mxu0 %v300
  %371 = vmatpush.msra.mxu0 %v299
  %372 = vmatpush.msra.mxu0 %v298
  %373 = vmatpush.msra.mxu0 %v297
  %374 = vmatpush.msra.mxu0 %v296
  %375 = vmatpush.msra.mxu0 %v295
  %376 = vmatpush.msra.mxu0 %v294
  %377 = vmatpush.msra.mxu0 %v293
  %378 = vmatpush.msra.mxu0 %v292
  %379 = vmatpush.msra.mxu0 %v291
  %380 = vmatpush.msra.mxu0 %v290
  %381 = vmatpush.msra.mxu0 %v289
  %382 = vmatpush.msra.mxu0 %v288
  %383 = vmatpush.msra.mxu0 %v287
  %384 = vmatpush.msra.mxu0 %v286
  %385 = vmatpush.msra.mxu0 %v285
  %386 = vmatmul.f32.gmra.mxu0 %v238
  %v387 = vpop.f32.mrf.mxu0
  %v388 = vadd.f32 %v323, %v387
  %389 = vmatmul.f32.gmra.mxu0 %v240
  %v390 = vpop.f32.mrf.mxu0
  %v391 = vadd.f32 %v326, %v390
  %392 = vmatmul.f32.gmra.mxu0 %v242
  %v393 = vpop.f32.mrf.mxu0
  %v394 = vadd.f32 %v329, %v393
  %395 = vmatmul.f32.gmra.mxu0 %v244
  %v396 = vpop.f32.mrf.mxu0
  %v397 = vadd.f32 %v332, %v396
  %398 = vmatmul.f32.gmra.mxu0 %v246
  %v399 = vpop.f32.mrf.mxu0
  %v400 = vadd.f32 %v335, %v399
  %401 = vmatmul.f32.gmra.mxu0 %v248
  %v402 = vpop.f32.mrf.mxu0
  %v403 = vadd.f32 %v338, %v402
  %404 = vmatmul.f32.gmra.mxu0 %v250
  %v405 = vpop.f32.mrf.mxu0
  %v406 = vadd.f32 %v341, %v405
  %407 = vmatmul.f32.gmra.mxu0 %v252
  %v408 = vpop.f32.mrf.mxu0
  %v409 = vadd.f32 %v344, %v408
  %410 = vmatmul.f32.gmra.mxu0 %v254
  %v411 = vpop.f32.mrf.mxu0
  %v412 = vadd.f32 %v347, %v411
  %413 = vmatmul.f32.gmra.mxu0 %v256
  %v414 = vpop.f32.mrf.mxu0
  %v415 = vadd.f32 %v350, %v414
  %416 = vmatmul.f32.gmra.mxu0 %v258
  %v417 = vpop.f32.mrf.mxu0
  %v418 = vadd.f32 %v353, %v417
  %419 = vmatmul.f32.gmra.mxu0 %v260
  %v420 = vpop.f32.mrf.mxu0
  %v421 = vadd.f32 %v356, %v420
  %422 = vmatmul.f32.gmra.mxu0 %v262
  %v423 = vpop.f32.mrf.mxu0
  %v424 = vadd.f32 %v359, %v423
  %425 = vmatmul.f32.gmra.mxu0 %v264
  %v426 = vpop.f32.mrf.mxu0
  %v427 = vadd.f32 %v362, %v426
  %428 = vmatmul.f32.gmra.mxu0 %v266
  %v429 = vpop.f32.mrf.mxu0
  %v430 = vadd.f32 %v365, %v429
  %431 = vmatmul.f32.gmra.mxu0 %v268
  %v432 = vpop.f32.mrf.mxu0
  %v433 = vadd.f32 %v368, %v432
  %434 = vdwg.mxu0
  %v435 = vmax.f32 %v388, 0.0
  %v436 = vmax.f32 %v391, 0.0
  %v437 = vmax.f32 %v394, 0.0
  %v438 = vmax.f32 %v397, 0.0
  %v439 = vmax.f32 %v400, 0.0
  %v440 = vmax.f32 %v403, 0.0
  %v441 = vmax.f32 %v406, 0.0
  %v442 = vmax.f32 %v409, 0.0
  %v443 = vmax.f32 %v412, 0.0
  %v444 = vmax.f32 %v415, 0.0
  %v445 = vmax.f32 %v418, 0.0
  %v446 = vmax.f32 %v421, 0.0
  %v447 = vmax.f32 %v424, 0.0
  %v448 = vmax.f32 %v427, 0.0
  %v449 = vmax.f32 %v430, 0.0
  %v450 = vmax.f32 %v433, 0.0
  %v451 = vld [vmem:[%s5] sm:$0x1]
  %v453 = vperm.slane %v451, 0
  %v455 = vmul.f32 %v435, %v453
  %v456 = vmul.f32 %v436, %v453
  %v457 = vmul.f32 %v437, %v453
  %v458 = vmul.f32 %v438, %v453
  %v459 = vmul.f32 %v439, %v453
  %v460 = vmul.f32 %v440, %v453
  %v461 = vmul.f32 %v441, %v453
  %v462 = vmul.f32 %v442, %v453
  %v463 = vmul.f32 %v443, %v453
  %v464 = vmul.f32 %v444, %v453
  %v465 = vmul.f32 %v445, %v453
  %v466 = vmul.f32 %v446, %v453
  %v467 = vmul.f32 %v447, %v453
  %v468 = vmul.f32 %v448, %v453
  %v469 = vmul.f32 %v449, %v453
  %v470 = vmul.f32 %v450, %v453
  %471 = vadd.xlane.f32.xlu0 %v455
  %v472 = vpop.xlane.xlu0 %471
  %473 = vadd.xlane.f32.xlu0 %v456
  %v474 = vpop.xlane.xlu0 %473
  %475 = vadd.xlane.f32.xlu0 %v457
  %v476 = vpop.xlane.xlu0 %475
  %477 = vadd.xlane.f32.xlu0 %v458
  %v478 = vpop.xlane.xlu0 %477
  %479 = vadd.xlane.f32.xlu0 %v459
  %v480 = vpop.xlane.xlu0 %479
  %481 = vadd.xlane.f32.xlu0 %v460
  %v482 = vpop.xlane.xlu0 %481
  %483 = vadd.xlane.f32.xlu0 %v461
  %v484 = vpop.xlane.xlu0 %483
  %485 = vadd.xlane.f32.xlu0 %v462
  %v486 = vpop.xlane.xlu0 %485
  %487 = vadd.xlane.f32.xlu0 %v463
  %v488 = vpop.xlane.xlu0 %487
  %489 = vadd.xlane.f32.xlu0 %v464
  %v490 = vpop.xlane.xlu0 %489
  %491 = vadd.xlane.f32.xlu0 %v465
  %v492 = vpop.xlane.xlu0 %491
  %493 = vadd.xlane.f32.xlu0 %v466
  %v494 = vpop.xlane.xlu0 %493
  %495 = vadd.xlane.f32.xlu0 %v467
  %v496 = vpop.xlane.xlu0 %495
  %497 = vadd.xlane.f32.xlu0 %v468
  %v498 = vpop.xlane.xlu0 %497
  %499 = vadd.xlane.f32.xlu0 %v469
  %v500 = vpop.xlane.xlu0 %499
  %501 = vadd.xlane.f32.xlu0 %v470
  %v502 = vpop.xlane.xlu0 %501
  %v503 = vld [vmem:[#allocation2] sm:$0x1]
  %505 = vset.pattern.permute.xlu0 0
  %506 = vperm.xlu0 %505, %v503
  %v507 = vpop.permute.xlu0 %506
  %v509 = vperm.slane %v507, 0
  %v510 = vadd.f32 %v472, %v509
  %v511 = vadd.f32 %v474, %v509
  %v512 = vadd.f32 %v476, %v509
  %v513 = vadd.f32 %v478, %v509
  %v514 = vadd.f32 %v480, %v509
  %v515 = vadd.f32 %v482, %v509
  %v516 = vadd.f32 %v484, %v509
  %v517 = vadd.f32 %v486, %v509
  %v518 = vadd.f32 %v488, %v509
  %v519 = vadd.f32 %v490, %v509
  %v520 = vadd.f32 %v492, %v509
  %v521 = vadd.f32 %v494, %v509
  %v522 = vadd.f32 %v496, %v509
  %v523 = vadd.f32 %v498, %v509
  %v524 = vadd.f32 %v500, %v509
  %v525 = vadd.f32 %v502, %v509
  %v542 = vlaneseq
  %v543 = vand.u32 %v542, 127
  %v544 = vperm.slane %v510, %v543
  %v545 = vadd.s32 %v543, 4294967288
  %v546 = vperm.slane %v511, %v545
  %vm547 = vcmask 130112
  %v548 = vsel %vm547, %v546, %v544
  %v549 = vadd.s32 %v543, 4294967280
  %v550 = vperm.slane %v512, %v549
  %vm551 = vcmask 195712
  %v552 = vsel %vm551, %v550, %v548
  %v553 = vadd.s32 %v543, 4294967272
  %v554 = vperm.slane %v513, %v553
  %vm555 = vcmask 261312
  %v556 = vsel %vm555, %v554, %v552
  %v557 = vadd.s32 %v543, 4294967264
  %v558 = vperm.slane %v514, %v557
  %vm559 = vcmask 326912
  %v560 = vsel %vm559, %v558, %v556
  %v561 = vadd.s32 %v543, 4294967256
  %v562 = vperm.slane %v515, %v561
  %vm563 = vcmask 392512
  %v564 = vsel %vm563, %v562, %v560
  %v565 = vadd.s32 %v543, 4294967248
  %v566 = vperm.slane %v516, %v565
  %vm567 = vcmask 458112
  %v568 = vsel %vm567, %v566, %v564
  %v569 = vadd.s32 %v543, 4294967240
  %v570 = vperm.slane %v517, %v569
  %vm571 = vcmask 523712
  %v572 = vsel %vm571, %v570, %v568
  %v573 = vadd.s32 %v543, 4294967232
  %v574 = vperm.slane %v518, %v573
  %vm575 = vcmask 589312
  %v576 = vsel %vm575, %v574, %v572
  %v577 = vadd.s32 %v543, 4294967224
  %v578 = vperm.slane %v519, %v577
  %vm579 = vcmask 654912
  %v580 = vsel %vm579, %v578, %v576
  %v581 = vadd.s32 %v543, 4294967216
  %v582 = vperm.slane %v520, %v581
  %vm583 = vcmask 720512
  %v584 = vsel %vm583, %v582, %v580
  %v585 = vadd.s32 %v543, 4294967208
  %v586 = vperm.slane %v521, %v585
  %vm587 = vcmask 786112
  %v588 = vsel %vm587, %v586, %v584
  %v589 = vadd.s32 %v543, 4294967200
  %v590 = vperm.slane %v522, %v589
  %vm591 = vcmask 851712
  %v592 = vsel %vm591, %v590, %v588
  %v593 = vadd.s32 %v543, 4294967192
  %v594 = vperm.slane %v523, %v593
  %vm595 = vcmask 917312
  %v596 = vsel %vm595, %v594, %v592
  %v597 = vadd.s32 %v543, 4294967184
  %v598 = vperm.slane %v524, %v597
  %vm599 = vcmask 982912
  %v600 = vsel %vm599, %v598, %v596
  %v601 = vadd.s32 %v543, 4294967176
  %v602 = vperm.slane %v525, %v601
  %vm603 = vcmask 1048512
  %v604 = vsel %vm603, %v602, %v600
  %606 = vst [vmem:[%s7] sm:$0x1] %v604
  // Predicated region
  $region30: #{mlp_forward.1} parent=0 // pred_check
    _
  $region31: #{mlp_forward.1} parent=0 // pred_check_branch
    %608 = sbr.rel (0) target = $region33
  $region32: #{mlp_forward.1} parent=0 // pred_region
    _
  $region33: #{mlp_forward.1} parent=0 // pred_fallthru
    _
  // Predicated region
  $region34: #{mlp_forward.1} parent=0 // pred_check
    _
  $region35: #{mlp_forward.1} parent=0 // pred_check_branch
    %610 = sbr.rel (0) target = $region37
  $region36: #{mlp_forward.1} parent=0 // pred_region
    _
  $region37: #{mlp_forward.1} parent=0 // pred_fallthru
    _

</llo_original>
